<compile_context>
chip_gen: v5e
topology: v5e:2x2
jax: 0.10.0
libtpu: 0.0.40
codegen_flags: <defaults>
</compile_context>

<pallas_src>
import functools
import math

import jax
import jax.numpy as jnp
from jax import lax
from jax.experimental import pallas as pl
from jax.experimental.pallas import tpu as pltpu


def _round_up(x, m):
    return ((x + m - 1) // m) * m


def _vmem_budgets():
    """(vmem_limit_bytes, per-step working-set budget), generation aware."""
    try:
        cap = pltpu.get_tpu_info().vmem_capacity_bytes
    except Exception:  # pragma: no cover - info query unavailable
        cap = None
    if cap is not None and cap >= 100 * 1024 * 1024:
        # v5e / v6e class parts: 128 MiB physical VMEM.
        return 100 * 1024 * 1024, 40 * 1024 * 1024
    # v7x class (64 MiB physical) or unknown: stay conservative.
    return 48 * 1024 * 1024, 16 * 1024 * 1024


def _per_batch_vmem(tq, L_k, D_k, D_v, in_isz, out_isz, mask_isz, has_mask):
    """Approximate VMEM bytes one batch element needs for one grid step."""
    total = (
        2 * (tq * D_k + L_k * (D_k + D_v)) * in_isz    # double-buffered q/k/v blocks
        + 2 * (tq * D_v + tq * L_k) * out_isz          # double-buffered ctx/attn blocks
        + 5 * tq * L_k * 4                             # live f32 (tq, L_k) temporaries
        + 2 * tq * D_v * 4                             # f32 ctx accumulator + cast
    )
    if has_mask:
        total += 2 * tq * L_k * mask_isz
    return total


def _largest_divisor_leq(n, cap):
    cap = max(1, min(n, cap))
    for d in range(cap, 0, -1):
        if n % d == 0:
            return d
    return 1


def _choose_tiles(B, L_k, L_q, D_k, D_v, in_isz, out_isz, mask_isz, has_mask,
                  step_budget):
    """Pick (tq, Bb, padded L_q) to fill the per-step VMEM budget."""
    sub = 16 if in_isz < 4 else 8  # bf16 sublane packing wants multiples of 16
    if L_q <= 256:
        tq_cands = [_round_up(L_q, sub)]           # one tile covers all queries
    else:
        tq_cands = [512, 256, 128]                 # MXU-friendly (256-row) tiles first
    tq = tq_cands[-1]
    for cand in tq_cands:
        if _per_batch_vmem(cand, L_k, D_k, D_v, in_isz, out_isz, mask_isz,
                           has_mask) <= step_budget:
            tq = cand
            break

    per_b = _per_batch_vmem(tq, L_k, D_k, D_v, in_isz, out_isz, mask_isz, has_mask)
    cap = max(1, step_budget // max(per_b, 1))
    Bb = _largest_divisor_leq(B, cap)

    L_qp = _round_up(L_q, tq)
    n_q = L_qp // tq
    # Keep at least 2 grid steps on a parallel axis when there is batch to split
    # (v7x has 2 TensorCores; a (1, 1) grid would idle half the chip).
    if n_q == 1 and B > 1 and Bb == B:
        Bb = _largest_divisor_leq(B, B // 2)
    return tq, Bb, L_qp


def sdpa_kernel(*refs, scale, has_mask, valid_lk):
    if has_mask:
        q_ref, k_ref, v_ref, mask_ref, ctx_ref, attn_ref = refs
    else:
        q_ref, k_ref, v_ref, ctx_ref, attn_ref = refs
        mask_ref = None

    q = q_ref[...]          # (Bb, tq, D_k), native dtype
    k = k_ref[...]          # (Bb, L_kp, D_k)
    v = v_ref[...]          # (Bb, L_kp, D_vp)

    # Fold the scale into q: touches L_q*D_k elements instead of L_q*L_k scores.
    # (For bf16 inputs this rounds q*scale to bf16 pre-MXU; negligible deviation.)
    if scale is not None:
        q = q * jnp.asarray(scale, dtype=q.dtype)

    # scores = q @ k^T, batched, contracting D_k without materializing k^T.
    s = lax.dot_general(
        q, k,
        dimension_numbers=(((2,), (2,)), ((0,), (0,))),
        preferred_element_type=jnp.float32)          # (Bb, tq, L_kp) f32

    neg_inf = jnp.float32(-jnp.inf)
    if mask_ref is not None:
        # masked_fill_(attn_mask, -inf): mask streams as bf16 0.0/1.0.
        s = jnp.where(mask_ref[...] > 0, neg_inf, s)
    if valid_lk is not None:
        # Lane-padding of the key axis: exclude padded key columns from the softmax.
        kidx = lax.broadcasted_iota(jnp.int32, s.shape, 2)
        s = jnp.where(kidx >= valid_lk, neg_inf, s)

    # Numerically stable softmax over the key axis (f32 elementwise math; v5e-safe).
    m = jnp.max(s, axis=-1, keepdims=True)
    p = jnp.exp(s - m)
    denom = jnp.sum(p, axis=-1, keepdims=True)
    inv = pl.reciprocal(denom, approx=True)          # EUP slot, ~free next to exp
    inv = inv * (2.0 - denom * inv)                  # one Newton step -> ~f32-exact
    attn = p * inv

    # dropout(p=0.0) is identity — omitted.
    attn_ref[...] = attn.astype(attn_ref.dtype)

    # context = attn @ v, batched; attn cast to v's dtype so the MXU runs bf16 for
    # bf16 inputs (accumulation stays f32).
    ctx = lax.dot_general(
        attn.astype(v.dtype), v,
        dimension_numbers=(((2,), (1,)), ((0,), (0,))),
        preferred_element_type=jnp.float32)          # (Bb, tq, D_vp)
    ctx_ref[...] = ctx.astype(ctx_ref.dtype)


def scaled_dot_product_attention(q, k, v, scale=None, attn_mask=None):
    """Pallas implementation of ScaledDotProductAttention.forward.

    Returns (context, attention) exactly like the torch module.
    """
    B, L_q, D_k = q.shape
    Bk, L_k, D_k2 = k.shape
    Bv, L_v, D_v = v.shape
    assert D_k == D_k2 and L_k == L_v and B == Bk == Bv

    in_dt = q.dtype
    in_isz = jnp.dtype(in_dt).itemsize
    out_isz = in_isz
    has_mask = attn_mask is not None
    mask_isz = 2  # bf16 mask

    vmem_limit, step_budget = _vmem_budgets()

    # Lane-dense output layouts: pad D_v / L_k to multiples of 128 so ctx and attn
    # writebacks are unmasked full-lane stores; padded key columns are neutralized
    # in-kernel, padded value columns are zero (exact after slicing).
    D_vp = D_v if D_v % 128 == 0 else _round_up(D_v, 128)
    L_kp = L_k if L_k % 128 == 0 else _round_up(L_k, 128)
    valid_lk = L_k if L_kp != L_k else None

    tq, Bb, L_qp = _choose_tiles(B, L_kp, L_q, D_k, D_vp, in_isz, out_isz,
                                 mask_isz, has_mask, step_budget)

    # Wrapper-side zero padding (ragged L_q -> tile multiple; lane-dense D_v / L_k).
    qp = q if L_qp == L_q else jnp.pad(q, ((0, 0), (0, L_qp - L_q), (0, 0)))
    kp = k if L_kp == L_k else jnp.pad(k, ((0, 0), (0, L_kp - L_k), (0, 0)))
    vp = v
    if L_kp != L_k or D_vp != D_v:
        vp = jnp.pad(v, ((0, 0), (0, L_kp - L_k), (0, D_vp - D_v)))

    inputs = [qp, kp, vp]
    in_specs = [
        pl.BlockSpec((Bb, tq, D_k), lambda b, qi: (b, qi, 0)),
        # K / V block indices only change with the batch axis -> resident across qi.
        pl.BlockSpec((Bb, L_kp, D_k), lambda b, qi: (b, 0, 0)),
        pl.BlockSpec((Bb, L_kp, D_vp), lambda b, qi: (b, 0, 0)),
    ]
    # TODO(synk): pipeline_mode=pl.Buffered(1) on the K/V specs would halve their VMEM
    # footprint (helps v7x); left off and conservatively double-counted in the budget.

    mask_bytes = 0
    if has_mask:
        m = attn_mask.astype(jnp.bfloat16)   # bf16 mask: half the HBM traffic of f32
        if L_qp != L_q or L_kp != L_k:
            m = jnp.pad(m, ((0, 0), (0, L_qp - L_q), (0, L_kp - L_k)))
        inputs.append(m)
        in_specs.append(pl.BlockSpec((Bb, tq, L_kp), lambda b, qi: (b, qi, 0)))
        mask_bytes = int(m.size) * mask_isz

    grid = (B // Bb, L_qp // tq)

    # TODO(synk): no L_k grid split (flash-style two-pass softmax); the single-pass
    # design keeps the full (tq, L_kp) f32 score row resident, which bounds usable
    # L_k on v7x's 64 MiB VMEM at very long contexts.
    kernel = functools.partial(sdpa_kernel, scale=scale, has_mask=has_mask,
                               valid_lk=valid_lk)

    cost = pl.CostEstimate(
        flops=2 * B * L_qp * L_kp * (D_k + D_vp),
        transcendentals=B * L_qp * L_kp,
        bytes_accessed=(int(qp.size) + int(kp.size) + int(vp.size)) * in_isz
        + mask_bytes
        + (B * L_qp * D_vp + B * L_qp * L_kp) * out_isz,
    )

    ctx, attn = pl.pallas_call(
        kernel,
        out_shape=(
            jax.ShapeDtypeStruct((B, L_qp, D_vp), in_dt),   # context (lane-dense)
            jax.ShapeDtypeStruct((B, L_qp, L_kp), in_dt),   # attention (lane-dense)
        ),
        grid_spec=pltpu.PrefetchScalarGridSpec(
            num_scalar_prefetch=0,
            grid=grid,
            in_specs=in_specs,
            out_specs=[
                pl.BlockSpec((Bb, tq, D_vp), lambda b, qi: (b, qi, 0)),
                pl.BlockSpec((Bb, tq, L_kp), lambda b, qi: (b, qi, 0)),
            ],
        ),
        compiler_params=pltpu.CompilerParams(
            dimension_semantics=("parallel", "parallel"),
            vmem_limit_bytes=vmem_limit,
        ),
        cost_estimate=cost,
    )(*inputs)

    # Slice the wrapper-side padding back off.
    if L_qp != L_q:
        ctx = ctx[:, :L_q]
        attn = attn[:, :L_q]
    if D_vp != D_v:
        ctx = ctx[..., :D_v]
    if L_kp != L_k:
        attn = attn[..., :L_k]
    return ctx, attn


def _reference(q, k, v, scale, attn_mask=None):
    s = jnp.einsum("bqd,bkd->bqk", q, k)
    if scale is not None:
        s = s * scale
    if attn_mask is not None:
        s = jnp.where(attn_mask, -jnp.inf, s)
    attn = jax.nn.softmax(s, axis=2)
    ctx = jnp.einsum("bqk,bkd->bqd", attn, v)
    return ctx, attn


if __name__ == "__main__":
    key = jax.random.PRNGKey(0)
    kq, kk, kv = jax.random.split(key, 3)

    # Case 1: tiny, lane-unaligned dims (exercises L_k / D_v padding + mask path).
    B, L_q, L_k, D_k, D_v = 2, 8, 8, 32, 32
    q = jax.random.normal(kq, (B, L_q, D_k), dtype=jnp.float32)
    k = jax.random.normal(kk, (B, L_k, D_k), dtype=jnp.float32)
    v = jax.random.normal(kv, (B, L_k, D_v), dtype=jnp.float32)
    scale = 1.0 / math.sqrt(D_k)

    ctx, attn = scaled_dot_product_attention(q, k, v, scale=scale)
    jax.block_until_ready((ctx, attn))
    ctx_r, attn_r = _reference(q, k, v, scale, None)
    assert ctx.shape == (B, L_q, D_v) and attn.shape == (B, L_q, L_k)
    assert jnp.allclose(ctx, ctx_r, atol=1e-5, rtol=1e-5)
    assert jnp.allclose(attn, attn_r, atol=1e-5, rtol=1e-5)

    # Masked path (causal-style mask; every query keeps at least one visible key).
    mask2d = jnp.triu(jnp.ones((L_q, L_k), dtype=bool), k=1)
    mask = jnp.broadcast_to(mask2d[None], (B, L_q, L_k))
    ctx_m, attn_m = scaled_dot_product_attention(q, k, v, scale=scale, attn_mask=mask)
    jax.block_until_ready((ctx_m, attn_m))
    ctx_rm, attn_rm = _reference(q, k, v, scale, mask)
    assert jnp.allclose(ctx_m, ctx_rm, atol=1e-5, rtol=1e-5)
    assert jnp.allclose(attn_m, attn_rm, atol=1e-5, rtol=1e-5)

    # Case 2: lane-aligned dims (no padding path, megacore-friendly (2, 1) grid).
    kq2, kk2, kv2 = jax.random.split(jax.random.PRNGKey(1), 3)
    B2, L2q, L2k, D2k, D2v = 2, 128, 128, 64, 128
    q2 = jax.random.normal(kq2, (B2, L2q, D2k), dtype=jnp.float32)
    k2 = jax.random.normal(kk2, (B2, L2k, D2k), dtype=jnp.float32)
    v2 = jax.random.normal(kv2, (B2, L2k, D2v), dtype=jnp.float32)
    scale2 = 1.0 / math.sqrt(D2k)
    ctx2, attn2 = scaled_dot_product_attention(q2, k2, v2, scale=scale2)
    jax.block_until_ready((ctx2, attn2))
    ctx2_r, attn2_r = _reference(q2, k2, v2, scale2, None)
    assert jnp.allclose(ctx2, ctx2_r, atol=1e-4, rtol=1e-4)
    assert jnp.allclose(attn2, attn2_r, atol=1e-5, rtol=1e-5)

    print("KERNEL_OK")
</pallas_src>

<mosaic_0001>
module attributes {stable_mosaic.version = 11 : i64} {
  func.func @sdpa_kernel(%arg0: i32, %arg1: i32, %arg2: memref<1x8x32xf32, #tpu.memory_space<vmem>>, %arg3: memref<1x128x32xf32, #tpu.memory_space<vmem>>, %arg4: memref<1x128x128xf32, #tpu.memory_space<vmem>>, %arg5: memref<1x8x128xf32, #tpu.memory_space<vmem>>, %arg6: memref<1x8x128xf32, #tpu.memory_space<vmem>>) attributes {dimension_semantics = [#tpu.dimension_semantics<parallel>, #tpu.dimension_semantics<parallel>], iteration_bounds = array<i64: 2, 1>, scalar_prefetch = 0 : i64, scratch_operands = 0 : i64, tpu.core_type = #tpu.core_type<tc>, window_params = [{transform_indices = @transform_0, window_bounds = array<i64: 1, 8, 32>}, {transform_indices = @transform_1, window_bounds = array<i64: 1, 128, 32>}, {transform_indices = @transform_2, window_bounds = array<i64: 1, 128, 128>}, {transform_indices = @transform_3, window_bounds = array<i64: 1, 8, 128>}, {transform_indices = @transform_4, window_bounds = array<i64: 1, 8, 128>}]} {
    %c0 = arith.constant 0 : index
    %c0_0 = arith.constant 0 : index
    %c0_1 = arith.constant 0 : index
    %0 = vector.load %arg2[%c0, %c0_0, %c0_1] : memref<1x8x32xf32, #tpu.memory_space<vmem>>, vector<1x8x32xf32>
    %c0_2 = arith.constant 0 : index
    %c0_3 = arith.constant 0 : index
    %c0_4 = arith.constant 0 : index
    %1 = vector.load %arg3[%c0_2, %c0_3, %c0_4] : memref<1x128x32xf32, #tpu.memory_space<vmem>>, vector<1x128x32xf32>
    %c0_5 = arith.constant 0 : index
    %c0_6 = arith.constant 0 : index
    %c0_7 = arith.constant 0 : index
    %2 = vector.load %arg4[%c0_5, %c0_6, %c0_7] : memref<1x128x128xf32, #tpu.memory_space<vmem>>, vector<1x128x128xf32>
    %cst = arith.constant 0.176776692 : f32
    %3 = vector.broadcast %cst : f32 to vector<1x8x32xf32>
    %4 = arith.mulf %0, %3 : vector<1x8x32xf32>
    %cst_8 = arith.constant dense<0.000000e+00> : vector<1x8x128xf32>
    %5 = tpu.matmul %4, %1, %cst_8 {dimension_numbers = #tpu.dot_dimension_numbers<[2], [2], [1], [1], [0, 0, 0, 1, 1, 1], [0], [0]>} : vector<1x8x32xf32>, vector<1x128x32xf32>, vector<1x8x128xf32> -> vector<1x8x128xf32>
    %6 = tpu.iota {dimensions = array<i32: 2>} : vector<1x8x128xi32>
    %c8_i32 = arith.constant 8 : i32
    %7 = vector.broadcast %c8_i32 : i32 to vector<1x8x128xi32>
    %8 = arith.cmpi sge, %6, %7 : vector<1x8x128xi32>
    %cst_9 = arith.constant 0xFF800000 : f32
    %9 = vector.broadcast %cst_9 : f32 to vector<1x8x128xf32>
    %10 = arith.select %8, %9, %5 : vector<1x8x128xi1>, vector<1x8x128xf32>
    %cst_10 = arith.constant dense<0xFF800000> : vector<1x8xf32>
    %11 = vector.multi_reduction <maximumf>, %10, %cst_10 [2] : vector<1x8x128xf32> to vector<1x8xf32>
    %12 = vector.shape_cast %11 : vector<1x8xf32> to vector<1x8x1xf32>
    %13 = vector.broadcast %12 : vector<1x8x1xf32> to vector<1x8x128xf32>
    %14 = arith.subf %10, %13 : vector<1x8x128xf32>
    %15 = math.exp %14 : vector<1x8x128xf32>
    %cst_11 = arith.constant dense<0.000000e+00> : vector<1x8xf32>
    %16 = vector.multi_reduction <add>, %15, %cst_11 [2] : vector<1x8x128xf32> to vector<1x8xf32>
    %17 = vector.shape_cast %16 : vector<1x8xf32> to vector<1x8x1xf32>
    %18 = tpu.reciprocal %17 {approx = true} : vector<1x8x1xf32> -> vector<1x8x1xf32>
    %19 = arith.mulf %17, %18 : vector<1x8x1xf32>
    %cst_12 = arith.constant 2.000000e+00 : f32
    %20 = vector.broadcast %cst_12 : f32 to vector<1x8x1xf32>
    %21 = arith.subf %20, %19 : vector<1x8x1xf32>
    %22 = arith.mulf %18, %21 : vector<1x8x1xf32>
    %23 = vector.broadcast %22 : vector<1x8x1xf32> to vector<1x8x128xf32>
    %24 = arith.mulf %15, %23 : vector<1x8x128xf32>
    %c0_13 = arith.constant 0 : index
    %c0_14 = arith.constant 0 : index
    %c0_15 = arith.constant 0 : index
    %25 = vector.load %arg6[%c0_13, %c0_14, %c0_15] : memref<1x8x128xf32, #tpu.memory_space<vmem>>, vector<1x8x128xf32>
    tpu.vector_store %arg6[%c0_13, %c0_14, %c0_15], %24 {strides = array<i32>} : memref<1x8x128xf32, #tpu.memory_space<vmem>>, vector<1x8x128xf32>,
    %cst_16 = arith.constant dense<0.000000e+00> : vector<1x8x128xf32>
    %26 = tpu.matmul %24, %2, %cst_16 {dimension_numbers = #tpu.dot_dimension_numbers<[2], [1], [1], [2], [0, 0, 0, 1, 1, 2], [0], [0]>} : vector<1x8x128xf32>, vector<1x128x128xf32>, vector<1x8x128xf32> -> vector<1x8x128xf32>
    %c0_17 = arith.constant 0 : index
    %c0_18 = arith.constant 0 : index
    %c0_19 = arith.constant 0 : index
    %27 = vector.load %arg5[%c0_17, %c0_18, %c0_19] : memref<1x8x128xf32, #tpu.memory_space<vmem>>, vector<1x8x128xf32>
    tpu.vector_store %arg5[%c0_17, %c0_18, %c0_19], %26 {strides = array<i32>} : memref<1x8x128xf32, #tpu.memory_space<vmem>>, vector<1x8x128xf32>,
    return
  }
  func.func @transform_0(%arg0: i32, %arg1: i32) -> (i32, i32, i32) {
    %c0_i32 = arith.constant 0 : i32
    %c0_i32_0 = arith.constant 0 : i32
    return %arg0, %arg1, %c0_i32 : i32, i32, i32
  }
  func.func @transform_1(%arg0: i32, %arg1: i32) -> (i32, i32, i32) {
    %c0_i32 = arith.constant 0 : i32
    %c0_i32_0 = arith.constant 0 : i32
    %c0_i32_1 = arith.constant 0 : i32
    return %arg0, %c0_i32, %c0_i32_0 : i32, i32, i32
  }
  func.func @transform_2(%arg0: i32, %arg1: i32) -> (i32, i32, i32) {
    %c0_i32 = arith.constant 0 : i32
    %c0_i32_0 = arith.constant 0 : i32
    %c0_i32_1 = arith.constant 0 : i32
    return %arg0, %c0_i32, %c0_i32_0 : i32, i32, i32
  }
  func.func @transform_3(%arg0: i32, %arg1: i32) -> (i32, i32, i32) {
    %c0_i32 = arith.constant 0 : i32
    %c0_i32_0 = arith.constant 0 : i32
    return %arg0, %arg1, %c0_i32 : i32, i32, i32
  }
  func.func @transform_4(%arg0: i32, %arg1: i32) -> (i32, i32, i32) {
    %c0_i32 = arith.constant 0 : i32
    %c0_i32_0 = arith.constant 0 : i32
    return %arg0, %arg1, %c0_i32 : i32, i32, i32
  }
}

</mosaic_0001>

<llo_original>
// kernel: tpu_custom_call.1
$region0: #{tpu_custom_call.1}
  #allocation0 [shape = 'u32[]', space=smem, size = 0x4, offset = 0x4, fixed_abs, tag = 'smem constant byte address 0x4 - core index']
  #allocation1 [shape = 'u32[72,128]{1,0:T(1,128)}', space=vmem, size = 0x9000, scoped, tag = 'internal scratch']
  %s0 = inlined_call_operand.vmem [shape: f32[2,8,32], index: 0, kind: input, shape index: {}]
  %s1 = inlined_call_operand.vmem [shape: f32[2,128,32], index: 1, kind: input, shape index: {}]
  %s2 = inlined_call_operand.vmem [shape: f32[2,128,128], index: 2, kind: input, shape index: {}]
  %s3 = inlined_call_operand.hbm [shape: f32[2,8,128], index: 3, kind: output, shape index: {0}]
  %s4 = inlined_call_operand.hbm [shape: f32[2,8,128], index: 4, kind: output, shape index: {1}]
  %5 = xla_tuple %s3, %s4
  %s6 = sld [smem:[#allocation0]]
  $region53: #{tpu_custom_call.1} parent=0
    _
  %s8 = ssub.s32 1, %s6
  %s9 = scalar_select 0, %s8, %s6
  $region1: #{tpu_custom_call.1} parent=0
    #allocation2 [shape = 'u8[8192]{0}', space=vmem, size = 0x2000, scoped, tag = 'output window, operand 0']
    #allocation3 [shape = 's32[2]{0}', space=sflag, size = 0x8, scoped, tag = 'scoped memory for tpu_custom_call.1']
    #allocation4 [shape = 'u8[8192]{0}', space=vmem, size = 0x2000, scoped, tag = 'output window, operand 1']
    #allocation5 [shape = 's32[2]{0}', space=sflag, size = 0x8, scoped, tag = 'scoped memory for tpu_custom_call.1']
    %10 = vsyncpa [#allocation3], 0
    %s11 = scalar_lea.sflag [#allocation3], 1
    %12 = vsyncpa %s11, 0
    %13 = vsyncpa [#allocation5], 0
    %s14 = scalar_lea.sflag [#allocation5], 1
    %15 = vsyncpa %s14, 0
    loop: start=0, step=1, limit=4
    $region2: #{tpu_custom_call.1} parent=1 // loop_pre_header
      _
    $region3: #{tpu_custom_call.1} parent=1 // loop_header
      %s17 = sphi 0, %s21
      %p18 = scmp.ge.s32.totalorder %s17, 4
      %s24 = sphi 0, %s36
      %s25 = sphi 0, %s32
      %s26 = sphi 0, %s24
      %s27 = sphi 0, %s25
      %s28 = sphi 0, %s26
      %s29 = sphi 0, %s27
      %s41 = sphi 0, %s43
      %s44 = sphi 0, %s41
      %s45 = sphi 0, %s44
      %s61 = sphi 0, %s45
      %s67 = sphi 0, %s69
      %s70 = sphi 0, %s67
      %s71 = sphi 0, %s70
      %s87 = sphi 0, %s71
      %s93 = sphi 0, %s95
      %s96 = sphi 0, %s93
      %s97 = sphi 0, %s96
      %s113 = sphi 0, %s97
      %s121 = sphi 0, %s123
      %s124 = sphi 0, %s121
      %s125 = sphi 0, %s124
      %s141 = sphi 0, %s125
      %s149 = sphi 0, %s151
      %s152 = sphi 0, %s149
      %s153 = sphi 0, %s152
      %s169 = sphi 0, %s153
    $region4: #{tpu_custom_call.1} parent=1 // loop_header_branch
      %20 = sbr.rel (%p18) target = $region8
    $region5: #{tpu_custom_call.1} parent=1 // loop_body
      %s22 = ssub.s32 %s17, 1
      %s23 = ssub.s32 %s17, 2
      %s30 = sadd.s32 1, %s25
      %p31 = scmp.ge.s32.totalorder %s30, 1
      %s32 = scalar_select %p31, 0, %s30
      %s33 = sadd.s32 1, %s24
      %s34 = scalar_select %p31, %s33, %s24
      %p35 = scmp.ge.s32.totalorder %s34, 2
      %s36 = scalar_select %p35, 0, %s34
      %s37 = ssub.s32 %s24, %s36
      %s38 = ssub.s32 %s25, %s32
      %s39 = sor.u32 %s37, %s38
      %p40 = scmp.eq.s32.totalorder %s39, 0
      %s42 = sadd.s32 %s41, 1
      %s43 = scalar_select %p40, %s41, %s42
      %p46 = pneg %p40
      %p47 = scmp.eq.s32.totalorder %s17, 1
      %p48 = por %p46, %p47
      %p49 = scmp.ne.s32.totalorder %s41, %s44
      %p50 = scmp.eq.s32.totalorder %s17, 0
      %p51 = por %p49, %p50
      %p52 = scmp.ne.s32.totalorder %s41, %s44
      %p53 = scmp.eq.s32.totalorder %s22, 1
      %p54 = por %p52, %p53
      %p55 = scmp.ne.s32.totalorder %s44, %s45
      %p56 = scmp.eq.s32.totalorder %s22, 0
      %p57 = por %p55, %p56
      %p58 = scmp.ne.s32.totalorder %s44, %s45
      %p59 = scmp.eq.s32.totalorder %s23, 1
      %p60 = por %p58, %p59
      %p62 = scmp.ne.s32.totalorder %s45, %s61
      %p63 = scmp.eq.s32.totalorder %s23, 0
      %p64 = por %p62, %p63
      %s65 = ssub.s32 %s24, %s36
      %p66 = scmp.eq.s32.totalorder %s65, 0
      %s68 = sadd.s32 %s67, 1
      %s69 = scalar_select %p66, %s67, %s68
      %p72 = pneg %p66
      %p73 = scmp.eq.s32.totalorder %s17, 1
      %p74 = por %p72, %p73
      %p75 = scmp.ne.s32.totalorder %s67, %s70
      %p76 = scmp.eq.s32.totalorder %s17, 0
      %p77 = por %p75, %p76
      %p78 = scmp.ne.s32.totalorder %s67, %s70
      %p79 = scmp.eq.s32.totalorder %s22, 1
      %p80 = por %p78, %p79
      %p81 = scmp.ne.s32.totalorder %s70, %s71
      %p82 = scmp.eq.s32.totalorder %s22, 0
      %p83 = por %p81, %p82
      %p84 = scmp.ne.s32.totalorder %s70, %s71
      %p85 = scmp.eq.s32.totalorder %s23, 1
      %p86 = por %p84, %p85
      %p88 = scmp.ne.s32.totalorder %s71, %s87
      %p89 = scmp.eq.s32.totalorder %s23, 0
      %p90 = por %p88, %p89
      %s91 = ssub.s32 %s24, %s36
      %p92 = scmp.eq.s32.totalorder %s91, 0
      %s94 = sadd.s32 %s93, 1
      %s95 = scalar_select %p92, %s93, %s94
      %p98 = pneg %p92
      %p99 = scmp.eq.s32.totalorder %s17, 1
      %p100 = por %p98, %p99
      %p101 = scmp.ne.s32.totalorder %s93, %s96
      %p102 = scmp.eq.s32.totalorder %s17, 0
      %p103 = por %p101, %p102
      %p104 = scmp.ne.s32.totalorder %s93, %s96
      %p105 = scmp.eq.s32.totalorder %s22, 1
      %p106 = por %p104, %p105
      %p107 = scmp.ne.s32.totalorder %s96, %s97
      %p108 = scmp.eq.s32.totalorder %s22, 0
      %p109 = por %p107, %p108
      %p110 = scmp.ne.s32.totalorder %s96, %s97
      %p111 = scmp.eq.s32.totalorder %s23, 1
      %p112 = por %p110, %p111
      %p114 = scmp.ne.s32.totalorder %s97, %s113
      %p115 = scmp.eq.s32.totalorder %s23, 0
      %p116 = por %p114, %p115
      %s117 = ssub.s32 %s24, %s36
      %s118 = ssub.s32 %s25, %s32
      %s119 = sor.u32 %s117, %s118
      %p120 = scmp.eq.s32.totalorder %s119, 0
      %s122 = sadd.s32 %s121, 1
      %s123 = scalar_select %p120, %s121, %s122
      %p126 = pneg %p120
      %p127 = scmp.eq.s32.totalorder %s17, 1
      %p128 = por %p126, %p127
      %p129 = scmp.ne.s32.totalorder %s121, %s124
      %p130 = scmp.eq.s32.totalorder %s17, 0
      %p131 = por %p129, %p130
      %p132 = scmp.ne.s32.totalorder %s121, %s124
      %p133 = scmp.eq.s32.totalorder %s22, 1
      %p134 = por %p132, %p133
      %p135 = scmp.ne.s32.totalorder %s124, %s125
      %p136 = scmp.eq.s32.totalorder %s22, 0
      %p137 = por %p135, %p136
      %p138 = scmp.ne.s32.totalorder %s124, %s125
      %p139 = scmp.eq.s32.totalorder %s23, 1
      %p140 = por %p138, %p139
      %p142 = scmp.ne.s32.totalorder %s125, %s141
      %p143 = scmp.eq.s32.totalorder %s23, 0
      %p144 = por %p142, %p143
      %s145 = ssub.s32 %s24, %s36
      %s146 = ssub.s32 %s25, %s32
      %s147 = sor.u32 %s145, %s146
      %p148 = scmp.eq.s32.totalorder %s147, 0
      %s150 = sadd.s32 %s149, 1
      %s151 = scalar_select %p148, %s149, %s150
      %p154 = pneg %p148
      %p155 = scmp.eq.s32.totalorder %s17, 1
      %p156 = por %p154, %p155
      %p157 = scmp.ne.s32.totalorder %s149, %s152
      %p158 = scmp.eq.s32.totalorder %s17, 0
      %p159 = por %p157, %p158
      %p160 = scmp.ne.s32.totalorder %s149, %s152
      %p161 = scmp.eq.s32.totalorder %s22, 1
      %p162 = por %p160, %p161
      %p163 = scmp.ne.s32.totalorder %s152, %s153
      %p164 = scmp.eq.s32.totalorder %s22, 0
      %p165 = por %p163, %p164
      %p166 = scmp.ne.s32.totalorder %s152, %s153
      %p167 = scmp.eq.s32.totalorder %s23, 1
      %p168 = por %p166, %p167
      %p170 = scmp.ne.s32.totalorder %s153, %s169
      %p171 = scmp.eq.s32.totalorder %s23, 0
      %p172 = por %p170, %p171
      %p173 = scmp.le.s32.totalorder 1, %s17
      %p174 = scmp.lt.s32.totalorder %s17, 3
      %p175 = pnand %p173, %p174
      %p176 = pneg %p175
      // Predicated region
      $region9: #{tpu_custom_call.1} parent=5 // pred_check
        _
      $region10: #{tpu_custom_call.1} parent=5 // pred_check_branch
        %178 = sbr.rel (%p175) target = $region12
      $region11: #{tpu_custom_call.1} parent=5 // pred_region
        %s179 = ssub.s32 %s17, 1
      $region12: #{tpu_custom_call.1} parent=5 // pred_fallthru
        _
      %p180 = scmp.lt.s32.totalorder %s17, 2
      // Predicated region
      $region13: #{tpu_custom_call.1} parent=5 // pred_check
        %p181 = pneg %p180
      $region14: #{tpu_custom_call.1} parent=5 // pred_check_branch
        %183 = sbr.rel (%p181) target = $region16
      $region15: #{tpu_custom_call.1} parent=5 // pred_region
        // Predicated region
        $region17: #{tpu_custom_call.1} parent=15 // pred_check
          %p184 = pneg %p51
        $region18: #{tpu_custom_call.1} parent=15 // pred_check_branch
          %186 = sbr.rel (%p184) target = $region20
        $region19: #{tpu_custom_call.1} parent=15 // pred_region
          %p187 = scmp.lt.s32.totalorder %s24, 1
          %s188 = scalar_select %p187, %s24, 1
          %p189 = scmp.lt.s32.totalorder %s25, 0
          %s190 = scalar_select %p189, %s25, 0
          %s191 = sadd.s32 %s190, %s188
          %s192 = smul.addr %s191, 8
          %s193 = scalar_lea.vmem %s0, %s192
        $region20: #{tpu_custom_call.1} parent=15 // pred_fallthru
          _
        // Predicated region
        $region21: #{tpu_custom_call.1} parent=15 // pred_check
          %p194 = pneg %p77
        $region22: #{tpu_custom_call.1} parent=15 // pred_check_branch
          %196 = sbr.rel (%p194) target = $region24
        $region23: #{tpu_custom_call.1} parent=15 // pred_region
          %p197 = scmp.lt.s32.totalorder %s24, 1
          %s198 = scalar_select %p197, %s24, 1
          %s199 = smul.addr %s198, 16
          %s200 = smul.addr %s199, 8
          %s201 = scalar_lea.vmem %s1, %s200
        $region24: #{tpu_custom_call.1} parent=15 // pred_fallthru
          _
        // Predicated region
        $region25: #{tpu_custom_call.1} parent=15 // pred_check
          %p202 = pneg %p103
        $region26: #{tpu_custom_call.1} parent=15 // pred_check_branch
          %204 = sbr.rel (%p202) target = $region28
        $region27: #{tpu_custom_call.1} parent=15 // pred_region
          %p205 = scmp.lt.s32.totalorder %s24, 1
          %s206 = scalar_select %p205, %s24, 1
          %s207 = smul.addr %s206, 16
          %s208 = smul.addr %s207, 8
          %s209 = scalar_lea.vmem %s2, %s208
        $region28: #{tpu_custom_call.1} parent=15 // pred_fallthru
          _
      $region16: #{tpu_custom_call.1} parent=5 // pred_fallthru
        _
      %p210 = scmp.le.s32.totalorder 1, %s17
      %p211 = scmp.lt.s32.totalorder %s17, 3
      %p212 = pnand %p210, %p211
      %p213 = pneg %p212
      // Predicated region
      $region29: #{tpu_custom_call.1} parent=5 // pred_check
        _
      $region30: #{tpu_custom_call.1} parent=5 // pred_check_branch
        %215 = sbr.rel (%p212) target = $region32
      $region31: #{tpu_custom_call.1} parent=5 // pred_region
        %s216 = ssub.s32 %s17, 1
        %p217 = scmp.lt.s32.totalorder %s26, 1
        %s218 = scalar_select %p217, %s26, 1
        %p219 = scmp.lt.s32.totalorder %s27, 0
        %s220 = scalar_select %p219, %s27, 0
        %s221 = sadd.s32 %s220, %s218
        %s222 = smul.addr %s221, 8
        %s223 = scalar_lea.vmem %s0, %s222
        %p224 = pneg %p57
        %p225 = pneg %p54
        %p226 = scmp.lt.s32.totalorder %s26, 1
        %s227 = scalar_select %p226, %s26, 1
        %s228 = smul.addr %s227, 16
        %s229 = smul.addr %s228, 8
        %s230 = scalar_lea.vmem %s1, %s229
        %p231 = pneg %p83
        %p232 = pneg %p80
        %p233 = scmp.lt.s32.totalorder %s26, 1
        %s234 = scalar_select %p233, %s26, 1
        %s235 = smul.addr %s234, 16
        %s236 = smul.addr %s235, 8
        %s237 = scalar_lea.vmem %s2, %s236
        %p238 = pneg %p109
        %p239 = pneg %p106
        %p240 = pneg %p137
        %p241 = pneg %p134
        %s242 = sand.u32 %s124, 1
        %s243 = scalar_lea.sflag [#allocation3], %s242
        %s244 = sand.u32 %s124, 1
        %s245 = smul.addr %s244, 8
        %s246 = scalar_lea.vmem [#allocation2], %s245
        %p247 = pneg %p165
        %p248 = pneg %p162
        %s249 = sand.u32 %s152, 1
        %s250 = scalar_lea.sflag [#allocation5], %s249
        %s251 = sand.u32 %s152, 1
        %s252 = smul.addr %s251, 8
        %s253 = scalar_lea.vmem [#allocation4], %s252
        %p254 = scmp.lt.s32.totalorder %s26, 1
        %s255 = scalar_select %p254, %s26, 1
        %p256 = scmp.lt.s32.totalorder %s27, 0
        %s257 = scalar_select %p256, %s27, 0
        %s258 = sadd.s32 %s257, %s255
        %s259 = smul.addr %s258, 8
        %s260 = scalar_lea.vmem %s0, %s259
        %p261 = scmp.lt.s32.totalorder %s26, 1
        %s262 = scalar_select %p261, %s26, 1
        %s263 = smul.addr %s262, 16
        %s264 = smul.addr %s263, 8
        %s265 = scalar_lea.vmem %s1, %s264
        %p266 = scmp.lt.s32.totalorder %s26, 1
        %s267 = scalar_select %p266, %s26, 1
        %s268 = smul.addr %s267, 16
        %s269 = smul.addr %s268, 8
        %s270 = scalar_lea.vmem %s2, %s269
        %v271 = vld [vmem:[%s260] sm:$0xff]
        %v272 = vld [vmem:[%s265] sm:$0xff]
        %v273 = vld [vmem:[%s265 + $0x8] sm:$0xff]
        %v274 = vld [vmem:[%s265 + $0x10] sm:$0xff]
        %v275 = vld [vmem:[%s265 + $0x18] sm:$0xff]
        %v276 = vld [vmem:[%s265 + $0x20] sm:$0xff]
        %v277 = vld [vmem:[%s265 + $0x28] sm:$0xff]
        %v278 = vld [vmem:[%s265 + $0x30] sm:$0xff]
        %v279 = vld [vmem:[%s265 + $0x38] sm:$0xff]
        %v280 = vld [vmem:[%s265 + $0x40] sm:$0xff]
        %v281 = vld [vmem:[%s265 + $0x48] sm:$0xff]
        %v282 = vld [vmem:[%s265 + $0x50] sm:$0xff]
        %v283 = vld [vmem:[%s265 + $0x58] sm:$0xff]
        %v284 = vld [vmem:[%s265 + $0x60] sm:$0xff]
        %v285 = vld [vmem:[%s265 + $0x68] sm:$0xff]
        %v286 = vld [vmem:[%s265 + $0x70] sm:$0xff]
        %v287 = vld [vmem:[%s265 + $0x78] sm:$0xff]
        %v288 = vld [vmem:[%s270] sm:$0xff]
        %v289 = vld [vmem:[%s270 + $0x8] sm:$0xff]
        %v290 = vld [vmem:[%s270 + $0x10] sm:$0xff]
        %v291 = vld [vmem:[%s270 + $0x18] sm:$0xff]
        %v292 = vld [vmem:[%s270 + $0x20] sm:$0xff]
        %v293 = vld [vmem:[%s270 + $0x28] sm:$0xff]
        %v294 = vld [vmem:[%s270 + $0x30] sm:$0xff]
        %v295 = vld [vmem:[%s270 + $0x38] sm:$0xff]
        %v296 = vld [vmem:[%s270 + $0x40] sm:$0xff]
        %v297 = vld [vmem:[%s270 + $0x48] sm:$0xff]
        %v298 = vld [vmem:[%s270 + $0x50] sm:$0xff]
        %v299 = vld [vmem:[%s270 + $0x58] sm:$0xff]
        %v300 = vld [vmem:[%s270 + $0x60] sm:$0xff]
        %v301 = vld [vmem:[%s270 + $0x68] sm:$0xff]
        %v302 = vld [vmem:[%s270 + $0x70] sm:$0xff]
        %v303 = vld [vmem:[%s270 + $0x78] sm:$0xff]
        %v304 = vmul.f32 %v271, 0.17677669
        %vm305 = vcmask 261120
        %v307 = vsel %vm305, %v304, 0
        %v310 = vsel %vm305, %v272, 0
        %v313 = vsel %vm305, %v273, 0
        %v316 = vsel %vm305, %v274, 0
        %v319 = vsel %vm305, %v275, 0
        %v322 = vsel %vm305, %v276, 0
        %v325 = vsel %vm305, %v277, 0
        %v328 = vsel %vm305, %v278, 0
        %v331 = vsel %vm305, %v279, 0
        %v334 = vsel %vm305, %v280, 0
        %v337 = vsel %vm305, %v281, 0
        %v340 = vsel %vm305, %v282, 0
        %v343 = vsel %vm305, %v283, 0
        %v346 = vsel %vm305, %v284, 0
        %v349 = vsel %vm305, %v285, 0
        %v352 = vsel %vm305, %v286, 0
        %v355 = vsel %vm305, %v287, 0
        %357 = vmatpush.xpose.msra.mxu0 %v355
        %358 = vmatpush.xpose.msra.mxu0 %v352
        %359 = vmatpush.xpose.msra.mxu0 %v349
        %360 = vmatpush.xpose.msra.mxu0 %v346
        %361 = vmatpush.xpose.msra.mxu0 %v343
        %362 = vmatpush.xpose.msra.mxu0 %v340
        %363 = vmatpush.xpose.msra.mxu0 %v337
        %364 = vmatpush.xpose.msra.mxu0 %v334
        %365 = vmatpush.xpose.msra.mxu0 %v331
        %366 = vmatpush.xpose.msra.mxu0 %v328
        %367 = vmatpush.xpose.msra.mxu0 %v325
        %368 = vmatpush.xpose.msra.mxu0 %v322
        %369 = vmatpush.xpose.msra.mxu0 %v319
        %370 = vmatpush.xpose.msra.mxu0 %v316
        %371 = vmatpush.xpose.msra.mxu0 %v313
        %372 = vmatpush.xpose.msra.mxu0 %v310
        %373 = vmatmul.f32.gmra.mxu0 %v307
        %v374 = vpop.f32.mrf.mxu0
        %v375 = vadd.f32 0.0, %v374
        %376 = vdwg.mxu0
        %v377 = vlaneseq
        %v378 = vand.u32 %v377, 127
        %vm379 = vcmp.ge.s32.totalorder %v378, 8
        %v380 = vsel %vm379, -inf, %v375
        %381 = vmax.xlane.f32.xlu0 %v380
        %v382 = vpop.xlane.xlu0 %381
        %v383 = vsub.f32 %v380, %v382
        %v384 = vmul.f32 %v383, 1.442695
        %v385 = vpow.pop %v384
        %386 = vadd.xlane.f32.xlu0 %v385
        %v387 = vpop.xlane.xlu0 %386
        %v388 = vrcp.pop %v387
        %v389 = vmul.f32 %v387, %v388
        %v390 = vsub.f32 2.0, %v389
        %v391 = vmul.f32 %v388, %v390
        %v392 = vmul.f32 %v385, %v391
        %393 = vst [vmem:[%s253] sm:$0xff] %v392
        %394 = vmatpush.msra.mxu0 %v303
        %395 = vmatpush.msra.mxu0 %v302
        %396 = vmatpush.msra.mxu0 %v301
        %397 = vmatpush.msra.mxu0 %v300
        %398 = vmatpush.msra.mxu0 %v299
        %399 = vmatpush.msra.mxu0 %v298
        %400 = vmatpush.msra.mxu0 %v297
        %401 = vmatpush.msra.mxu0 %v296
        %402 = vmatpush.msra.mxu0 %v295
        %403 = vmatpush.msra.mxu0 %v294
        %404 = vmatpush.msra.mxu0 %v293
        %405 = vmatpush.msra.mxu0 %v292
        %406 = vmatpush.msra.mxu0 %v291
        %407 = vmatpush.msra.mxu0 %v290
        %408 = vmatpush.msra.mxu0 %v289
        %409 = vmatpush.msra.mxu0 %v288
        %410 = vmatmul.f32.gmra.mxu0 %v392
        %v411 = vpop.f32.mrf.mxu0
        %v412 = vadd.f32 0.0, %v411
        %413 = vdwg.mxu0
        %414 = vst [vmem:[%s246] sm:$0xff] %v412
        %s415 = sand.u32 %s124, 1
        %s416 = scalar_lea.sflag [#allocation3], %s415
        %s417 = sand.u32 %s124, 1
        %s418 = smul.addr %s417, 8
        %s419 = scalar_lea.vmem [#allocation2], %s418
        %s420 = sand.u32 %s152, 1
        %s421 = scalar_lea.sflag [#allocation5], %s420
        %s422 = sand.u32 %s152, 1
        %s423 = smul.addr %s422, 8
        %s424 = scalar_lea.vmem [#allocation4], %s423
        // Predicated region
        $region33: #{tpu_custom_call.1} parent=31 // pred_check
          %p425 = pneg %p134
        $region34: #{tpu_custom_call.1} parent=31 // pred_check_branch
          %427 = sbr.rel (%p425) target = $region36
        $region35: #{tpu_custom_call.1} parent=31 // pred_region
          %429 = vsyncadd %s416, 0
          %s430 = sadd.s32 %s27, %s26
          %s431 = smul.addr %s430, 8
          %s432 = scalar_lea.hbm %s3, %s431
          %s434 = sshll.u32 %s419, 4
          %s435 = int_to_ptr.vmem [resolvable:$true] %s434
          %s436 = sshll.u32 %s432, 4
          %s437 = int_to_ptr.hbm [resolvable:$true] %s436
          %439 = dma.vmem_to_hbm [thread:$0]  %s435, 128, %s437, %s416
        $region36: #{tpu_custom_call.1} parent=31 // pred_fallthru
          _
        // Predicated region
        $region37: #{tpu_custom_call.1} parent=31 // pred_check
          %p440 = pneg %p162
        $region38: #{tpu_custom_call.1} parent=31 // pred_check_branch
          %442 = sbr.rel (%p440) target = $region40
        $region39: #{tpu_custom_call.1} parent=31 // pred_region
          %444 = vsyncadd %s421, 0
          %s445 = sadd.s32 %s27, %s26
          %s446 = smul.addr %s445, 8
          %s447 = scalar_lea.hbm %s4, %s446
          %s449 = sshll.u32 %s424, 4
          %s450 = int_to_ptr.vmem [resolvable:$true] %s449
          %s451 = sshll.u32 %s447, 4
          %s452 = int_to_ptr.hbm [resolvable:$true] %s451
          %454 = dma.vmem_to_hbm [thread:$0]  %s450, 128, %s452, %s421
        $region40: #{tpu_custom_call.1} parent=31 // pred_fallthru
          _
      $region32: #{tpu_custom_call.1} parent=5 // pred_fallthru
        _
      %p455 = scmp.le.s32.totalorder 2, %s17
      // Predicated region
      $region41: #{tpu_custom_call.1} parent=5 // pred_check
        %p456 = pneg %p455
      $region42: #{tpu_custom_call.1} parent=5 // pred_check_branch
        %458 = sbr.rel (%p456) target = $region44
      $region43: #{tpu_custom_call.1} parent=5 // pred_region
        %s459 = ssub.s32 %s17, 2
        // Predicated region
        $region45: #{tpu_custom_call.1} parent=43 // pred_check
          %p460 = pneg %p140
        $region46: #{tpu_custom_call.1} parent=43 // pred_check_branch
          %462 = sbr.rel (%p460) target = $region48
        $region47: #{tpu_custom_call.1} parent=43 // pred_region
          %s463 = sand.u32 %s125, 1
          %s464 = scalar_lea.sflag [#allocation3], %s463
          %s465 = sand.u32 %s125, 1
          %s466 = smul.addr %s465, 8
          %s467 = scalar_lea.vmem [#allocation2], %s466
          %469 = dma.done %s464, 128
        $region48: #{tpu_custom_call.1} parent=43 // pred_fallthru
          _
        // Predicated region
        $region49: #{tpu_custom_call.1} parent=43 // pred_check
          %p470 = pneg %p168
        $region50: #{tpu_custom_call.1} parent=43 // pred_check_branch
          %472 = sbr.rel (%p470) target = $region52
        $region51: #{tpu_custom_call.1} parent=43 // pred_region
          %s473 = sand.u32 %s153, 1
          %s474 = scalar_lea.sflag [#allocation5], %s473
          %s475 = sand.u32 %s153, 1
          %s476 = smul.addr %s475, 8
          %s477 = scalar_lea.vmem [#allocation4], %s476
          %479 = dma.done %s474, 128
        $region52: #{tpu_custom_call.1} parent=43 // pred_fallthru
          _
      $region44: #{tpu_custom_call.1} parent=5 // pred_fallthru
        _
    $region6: #{tpu_custom_call.1} parent=1 // loop_footer
      %s21 = sadd.s32 1, %s17
    $region7: #{tpu_custom_call.1} parent=1 // loop_footer_branch
      %16 = sbr.rel target = $region3
    $region8: #{tpu_custom_call.1} parent=1 // loop_exit
      _
    %480 = vsyncpa [#allocation3], 1
    %s481 = scalar_lea.sflag [#allocation3], 1
    %482 = vsyncpa %s481, 1
    %483 = vsyncpa [#allocation5], 1
    %s484 = scalar_lea.sflag [#allocation5], 1
    %485 = vsyncpa %s484, 1

</llo_original>
